<compile_context>
chip_gen: v7x
topology: tpu7x:2x2x1
jax: 0.10.0
libtpu: 0.0.40
codegen_flags: <defaults>
</compile_context>

<pallas_src>
import jax
import jax.numpy as jnp
from jax.experimental import pallas as pl
from jax.experimental.pallas import tpu as pltpu


def _round_up(a, b):
    return ((a + b - 1) // b) * b


def _conv1x1_kernel(x_ref, w_ref, b_ref, o_ref):
    # x_ref: (1, Cin, S, L) VMEM   w_ref: (Cout*Cin,) SMEM   b_ref: (Cout,) SMEM
    # o_ref: (1, Cout, S, L) VMEM
    cin = x_ref.shape[1]
    cout = o_ref.shape[1]

    # Hoist all SMEM scalar reads out of the unrolled FMA chain.
    w = [w_ref[i] for i in range(cout * cin)]
    b = [b_ref[co] for co in range(cout)]

    # Each channel slab is a dense (S, L) tile: full 8-sublane x 128-lane vregs.
    x = [x_ref[0, ci] for ci in range(cin)]

    for co in range(cout):                       # tiny static loops: fully unrolled
        acc = x[0] * w[co * cin] + b[co]         # bias folded into the first FMA
        for ci in range(1, cin):
            acc = acc + x[ci] * w[co * cin + ci]
        o_ref[0, co] = acc                       # dense, unmasked (S, L) store


def conv4_forward(x_nchw, weight, bias, *, lane=512, tile_pixels=256 * 1024):
    """x_nchw: (N, 3, H, W) f32; weight: (4, 3, 1, 1); bias: (4,). Returns (N, 4, H, W)."""
    N, Cin, H, W = x_nchw.shape
    Cout = weight.shape[0]
    HW = H * W

    # ---- pixel-axis repacking: (N, C, HW) -> (N, C, R, L) -------------------
    # L: lane width (multiple of 128). R: sublane rows; S rows per block so the
    # kernel sees sublane-dense (S, L) slabs.
    L = lane if HW >= lane else _round_up(HW, 128)
    rows = pl.cdiv(HW, L)
    target_s = max(8, (tile_pixels // L) // 8 * 8)
    if rows <= target_s:
        # Small image: a single pixel tile per batch element (block == full dim).
        S = rows
        R = rows
    else:
        S = target_s
        R = _round_up(rows, S)        # no remainder blocks -> unmasked stores
    HW_pad = R * L

    x3 = x_nchw.reshape(N, Cin, HW)
    if HW_pad != HW:
        x3 = jnp.pad(x3, ((0, 0), (0, 0), (0, HW_pad - HW)))
    x4 = x3.reshape(N, Cin, R, L)

    w_flat = weight.reshape(Cout * Cin)      # 12 scalars -> SMEM
    b_flat = bias.reshape(Cout)              # 4 scalars  -> SMEM

    grid = (N, R // S)

    out4 = pl.pallas_call(
        _conv1x1_kernel,
        out_shape=jax.ShapeDtypeStruct((N, Cout, R, L), x_nchw.dtype),
        grid_spec=pltpu.PrefetchScalarGridSpec(
            num_scalar_prefetch=0,
            grid=grid,
            in_specs=[
                pl.BlockSpec((1, Cin, S, L), lambda n, t: (n, 0, t, 0)),
                pl.BlockSpec(memory_space=pltpu.MemorySpace.SMEM),   # weights
                pl.BlockSpec(memory_space=pltpu.MemorySpec.SMEM) if False else
                pl.BlockSpec(memory_space=pltpu.MemorySpace.SMEM),   # bias
            ],
            out_specs=pl.BlockSpec((1, Cout, S, L), lambda n, t: (n, 0, t, 0)),
        ),
        compiler_params=pltpu.CompilerParams(
            dimension_semantics=("parallel", "parallel"),
            # ~14 MiB double-buffered at the default tile; explicit limit keeps
            # v5e (16 MiB scoped default) happy and stays well under v7x's
            # 64 MiB physical VMEM.
            vmem_limit_bytes=48 << 20,
        ),
    )(x4, w_flat, b_flat)

    out3 = out4.reshape(N, Cout, HW_pad)
    if HW_pad != HW:
        out3 = out3[:, :, :HW]
    return out3.reshape(N, Cout, H, W)


if __name__ == "__main__":
    key = jax.random.PRNGKey(0)
    k_x, k_w, k_b = jax.random.split(key, 3)

    # Small shapes consistent with the module: batch=2, in_channels=3, 16x16 spatial.
    N, Cin, H, W, Cout = 2, 3, 16, 16, 4
    x = jax.random.normal(k_x, (N, Cin, H, W), dtype=jnp.float32)

    # Deterministic parameter init (mirrors nn.Conv2d's uniform(-bound, bound),
    # bound = 1/sqrt(fan_in), fan_in = Cin * 1 * 1).
    bound = 1.0 / jnp.sqrt(jnp.float32(Cin))
    weight = jax.random.uniform(k_w, (Cout, Cin, 1, 1), jnp.float32, -bound, bound)
    bias = jax.random.uniform(k_b, (Cout,), jnp.float32, -bound, bound)

    out = conv4_forward(x, weight, bias)
    jax.block_until_ready(out)

    # Sanity check against a plain-JAX reference of the 1x1 conv.
    ref = jnp.einsum("nchw,oc->nohw", x, weight.reshape(Cout, Cin)) + bias[None, :, None, None]
    assert out.shape == (N, Cout, H, W)
    assert jnp.allclose(out, ref, atol=1e-5, rtol=1e-5)

    print("KERNEL_OK")
</pallas_src>

<mosaic_0001>
module attributes {stable_mosaic.version = 11 : i64} {
  func.func @_conv1x1_kernel(%arg0: i32, %arg1: i32, %arg2: memref<1x3x1x256xf32, #tpu.memory_space<vmem>>, %arg3: memref<12xf32, #tpu.memory_space<smem>>, %arg4: memref<4xf32, #tpu.memory_space<smem>>, %arg5: memref<1x4x1x256xf32, #tpu.memory_space<vmem>>) attributes {dimension_semantics = [#tpu.dimension_semantics<parallel>, #tpu.dimension_semantics<parallel>], iteration_bounds = array<i64: 2, 1>, scalar_prefetch = 0 : i64, scratch_operands = 0 : i64, tpu.core_type = #tpu.core_type<tc>, window_params = [{transform_indices = @transform_0, window_bounds = array<i64: 1, 3, 1, 256>}, {transform_indices = @transform_1, window_bounds = array<i64: 12>}, {transform_indices = @transform_2, window_bounds = array<i64: 4>}, {transform_indices = @transform_3, window_bounds = array<i64: 1, 4, 1, 256>}]} {
    %c0 = arith.constant 0 : index
    %0 = memref.load %arg3[%c0] : memref<12xf32, #tpu.memory_space<smem>>
    %c1 = arith.constant 1 : index
    %1 = memref.load %arg3[%c1] : memref<12xf32, #tpu.memory_space<smem>>
    %c2 = arith.constant 2 : index
    %2 = memref.load %arg3[%c2] : memref<12xf32, #tpu.memory_space<smem>>
    %c3 = arith.constant 3 : index
    %3 = memref.load %arg3[%c3] : memref<12xf32, #tpu.memory_space<smem>>
    %c4 = arith.constant 4 : index
    %4 = memref.load %arg3[%c4] : memref<12xf32, #tpu.memory_space<smem>>
    %c5 = arith.constant 5 : index
    %5 = memref.load %arg3[%c5] : memref<12xf32, #tpu.memory_space<smem>>
    %c6 = arith.constant 6 : index
    %6 = memref.load %arg3[%c6] : memref<12xf32, #tpu.memory_space<smem>>
    %c7 = arith.constant 7 : index
    %7 = memref.load %arg3[%c7] : memref<12xf32, #tpu.memory_space<smem>>
    %c8 = arith.constant 8 : index
    %8 = memref.load %arg3[%c8] : memref<12xf32, #tpu.memory_space<smem>>
    %c9 = arith.constant 9 : index
    %9 = memref.load %arg3[%c9] : memref<12xf32, #tpu.memory_space<smem>>
    %c10 = arith.constant 10 : index
    %10 = memref.load %arg3[%c10] : memref<12xf32, #tpu.memory_space<smem>>
    %c11 = arith.constant 11 : index
    %11 = memref.load %arg3[%c11] : memref<12xf32, #tpu.memory_space<smem>>
    %c0_0 = arith.constant 0 : index
    %12 = memref.load %arg4[%c0_0] : memref<4xf32, #tpu.memory_space<smem>>
    %c1_1 = arith.constant 1 : index
    %13 = memref.load %arg4[%c1_1] : memref<4xf32, #tpu.memory_space<smem>>
    %c2_2 = arith.constant 2 : index
    %14 = memref.load %arg4[%c2_2] : memref<4xf32, #tpu.memory_space<smem>>
    %c3_3 = arith.constant 3 : index
    %15 = memref.load %arg4[%c3_3] : memref<4xf32, #tpu.memory_space<smem>>
    %c0_4 = arith.constant 0 : index
    %c0_5 = arith.constant 0 : index
    %c0_6 = arith.constant 0 : index
    %c0_7 = arith.constant 0 : index
    %16 = vector.load %arg2[%c0_4, %c0_5, %c0_6, %c0_7] : memref<1x3x1x256xf32, #tpu.memory_space<vmem>>, vector<1x1x1x256xf32>
    %17 = vector.shape_cast %16 : vector<1x1x1x256xf32> to vector<1x256xf32>
    %c0_8 = arith.constant 0 : index
    %c1_9 = arith.constant 1 : index
    %c0_10 = arith.constant 0 : index
    %c0_11 = arith.constant 0 : index
    %18 = vector.load %arg2[%c0_8, %c1_9, %c0_10, %c0_11] : memref<1x3x1x256xf32, #tpu.memory_space<vmem>>, vector<1x1x1x256xf32>
    %19 = vector.shape_cast %18 : vector<1x1x1x256xf32> to vector<1x256xf32>
    %c0_12 = arith.constant 0 : index
    %c2_13 = arith.constant 2 : index
    %c0_14 = arith.constant 0 : index
    %c0_15 = arith.constant 0 : index
    %20 = vector.load %arg2[%c0_12, %c2_13, %c0_14, %c0_15] : memref<1x3x1x256xf32, #tpu.memory_space<vmem>>, vector<1x1x1x256xf32>
    %21 = vector.shape_cast %20 : vector<1x1x1x256xf32> to vector<1x256xf32>
    %22 = vector.broadcast %0 : f32 to vector<1x256xf32>
    %23 = arith.mulf %17, %22 : vector<1x256xf32>
    %24 = vector.broadcast %12 : f32 to vector<1x256xf32>
    %25 = arith.addf %23, %24 : vector<1x256xf32>
    %26 = vector.broadcast %1 : f32 to vector<1x256xf32>
    %27 = arith.mulf %19, %26 : vector<1x256xf32>
    %28 = arith.addf %25, %27 : vector<1x256xf32>
    %29 = vector.broadcast %2 : f32 to vector<1x256xf32>
    %30 = arith.mulf %21, %29 : vector<1x256xf32>
    %31 = arith.addf %28, %30 : vector<1x256xf32>
    %c0_16 = arith.constant 0 : index
    %c0_17 = arith.constant 0 : index
    %c0_18 = arith.constant 0 : index
    %c0_19 = arith.constant 0 : index
    %32 = vector.load %arg5[%c0_16, %c0_17, %c0_18, %c0_19] : memref<1x4x1x256xf32, #tpu.memory_space<vmem>>, vector<1x1x1x256xf32>
    %33 = vector.shape_cast %32 : vector<1x1x1x256xf32> to vector<1x256xf32>
    %34 = vector.shape_cast %31 : vector<1x256xf32> to vector<1x1x1x256xf32>
    tpu.vector_store %arg5[%c0_16, %c0_17, %c0_18, %c0_19], %34 {strides = array<i32>} : memref<1x4x1x256xf32, #tpu.memory_space<vmem>>, vector<1x1x1x256xf32>,
    %35 = vector.broadcast %3 : f32 to vector<1x256xf32>
    %36 = arith.mulf %17, %35 : vector<1x256xf32>
    %37 = vector.broadcast %13 : f32 to vector<1x256xf32>
    %38 = arith.addf %36, %37 : vector<1x256xf32>
    %39 = vector.broadcast %4 : f32 to vector<1x256xf32>
    %40 = arith.mulf %19, %39 : vector<1x256xf32>
    %41 = arith.addf %38, %40 : vector<1x256xf32>
    %42 = vector.broadcast %5 : f32 to vector<1x256xf32>
    %43 = arith.mulf %21, %42 : vector<1x256xf32>
    %44 = arith.addf %41, %43 : vector<1x256xf32>
    %c0_20 = arith.constant 0 : index
    %c1_21 = arith.constant 1 : index
    %c0_22 = arith.constant 0 : index
    %c0_23 = arith.constant 0 : index
    %45 = vector.load %arg5[%c0_20, %c1_21, %c0_22, %c0_23] : memref<1x4x1x256xf32, #tpu.memory_space<vmem>>, vector<1x1x1x256xf32>
    %46 = vector.shape_cast %45 : vector<1x1x1x256xf32> to vector<1x256xf32>
    %47 = vector.shape_cast %44 : vector<1x256xf32> to vector<1x1x1x256xf32>
    tpu.vector_store %arg5[%c0_20, %c1_21, %c0_22, %c0_23], %47 {strides = array<i32>} : memref<1x4x1x256xf32, #tpu.memory_space<vmem>>, vector<1x1x1x256xf32>,
    %48 = vector.broadcast %6 : f32 to vector<1x256xf32>
    %49 = arith.mulf %17, %48 : vector<1x256xf32>
    %50 = vector.broadcast %14 : f32 to vector<1x256xf32>
    %51 = arith.addf %49, %50 : vector<1x256xf32>
    %52 = vector.broadcast %7 : f32 to vector<1x256xf32>
    %53 = arith.mulf %19, %52 : vector<1x256xf32>
    %54 = arith.addf %51, %53 : vector<1x256xf32>
    %55 = vector.broadcast %8 : f32 to vector<1x256xf32>
    %56 = arith.mulf %21, %55 : vector<1x256xf32>
    %57 = arith.addf %54, %56 : vector<1x256xf32>
    %c0_24 = arith.constant 0 : index
    %c2_25 = arith.constant 2 : index
    %c0_26 = arith.constant 0 : index
    %c0_27 = arith.constant 0 : index
    %58 = vector.load %arg5[%c0_24, %c2_25, %c0_26, %c0_27] : memref<1x4x1x256xf32, #tpu.memory_space<vmem>>, vector<1x1x1x256xf32>
    %59 = vector.shape_cast %58 : vector<1x1x1x256xf32> to vector<1x256xf32>
    %60 = vector.shape_cast %57 : vector<1x256xf32> to vector<1x1x1x256xf32>
    tpu.vector_store %arg5[%c0_24, %c2_25, %c0_26, %c0_27], %60 {strides = array<i32>} : memref<1x4x1x256xf32, #tpu.memory_space<vmem>>, vector<1x1x1x256xf32>,
    %61 = vector.broadcast %9 : f32 to vector<1x256xf32>
    %62 = arith.mulf %17, %61 : vector<1x256xf32>
    %63 = vector.broadcast %15 : f32 to vector<1x256xf32>
    %64 = arith.addf %62, %63 : vector<1x256xf32>
    %65 = vector.broadcast %10 : f32 to vector<1x256xf32>
    %66 = arith.mulf %19, %65 : vector<1x256xf32>
    %67 = arith.addf %64, %66 : vector<1x256xf32>
    %68 = vector.broadcast %11 : f32 to vector<1x256xf32>
    %69 = arith.mulf %21, %68 : vector<1x256xf32>
    %70 = arith.addf %67, %69 : vector<1x256xf32>
    %c0_28 = arith.constant 0 : index
    %c3_29 = arith.constant 3 : index
    %c0_30 = arith.constant 0 : index
    %c0_31 = arith.constant 0 : index
    %71 = vector.load %arg5[%c0_28, %c3_29, %c0_30, %c0_31] : memref<1x4x1x256xf32, #tpu.memory_space<vmem>>, vector<1x1x1x256xf32>
    %72 = vector.shape_cast %71 : vector<1x1x1x256xf32> to vector<1x256xf32>
    %73 = vector.shape_cast %70 : vector<1x256xf32> to vector<1x1x1x256xf32>
    tpu.vector_store %arg5[%c0_28, %c3_29, %c0_30, %c0_31], %73 {strides = array<i32>} : memref<1x4x1x256xf32, #tpu.memory_space<vmem>>, vector<1x1x1x256xf32>,
    return
  }
  func.func @transform_0(%arg0: i32, %arg1: i32) -> (i32, i32, i32, i32) {
    %c0_i32 = arith.constant 0 : i32
    %c0_i32_0 = arith.constant 0 : i32
    %c0_i32_1 = arith.constant 0 : i32
    return %arg0, %c0_i32, %arg1, %c0_i32_0 : i32, i32, i32, i32
  }
  func.func @transform_1(%arg0: i32, %arg1: i32) -> i32 {
    %c0_i32 = arith.constant 0 : i32
    %c0_i32_0 = arith.constant 0 : i32
    return %c0_i32 : i32
  }
  func.func @transform_2(%arg0: i32, %arg1: i32) -> i32 {
    %c0_i32 = arith.constant 0 : i32
    %c0_i32_0 = arith.constant 0 : i32
    return %c0_i32 : i32
  }
  func.func @transform_3(%arg0: i32, %arg1: i32) -> (i32, i32, i32, i32) {
    %c0_i32 = arith.constant 0 : i32
    %c0_i32_0 = arith.constant 0 : i32
    %c0_i32_1 = arith.constant 0 : i32
    return %arg0, %c0_i32, %arg1, %c0_i32_0 : i32, i32, i32, i32
  }
}

</mosaic_0001>

<llo_original>
// kernel: tpu_custom_call.1
$region0: #{tpu_custom_call.1}
  #allocation0 [shape = 'u32[]', space=smem, size = 0x4, offset = 0x4, fixed_abs, tag = 'smem constant byte address 0x4 - core index']
  #allocation1 [shape = 'u32[144,128]{1,0:T(1,128)}', space=vmem, size = 0x12000, scoped, tag = 'internal scratch']
  %s0 = inlined_call_operand.hbm [shape: f32[2,3,1,256], index: 0, kind: input, shape index: {}]
  %s1 = inlined_call_operand.vmem [shape: f32[12], index: 1, kind: input, shape index: {}]
  %s2 = inlined_call_operand.vmem [shape: f32[4], index: 2, kind: input, shape index: {}]
  %s3 = inlined_call_operand.hbm [shape: f32[2,4,1,256], index: 3, kind: output, shape index: {}]
  %s4 = sld [smem:[#allocation0]]
  $region57: #{tpu_custom_call.1} parent=0
    _
  %s6 = ssub.s32 1, %s4
  %s7 = scalar_select 0, %s6, %s4
  $region1: #{tpu_custom_call.1} parent=0
    #allocation2 [shape = 'u8[6144]{0}', space=vmem, size = 0x1800, scoped, tag = 'input window, operand 0']
    #allocation3 [shape = 's32[2]{0}', space=sflag, size = 0x8, scoped, tag = 'scoped memory for tpu_custom_call.1']
    #allocation4 [shape = 's32[2]{0}', space=sflag, size = 0x8, scoped, tag = 'scoped memory for tpu_custom_call.1']
    #allocation5 [shape = 's32[2]{0}', space=sflag, size = 0x8, scoped, tag = 'scoped memory for tpu_custom_call.1']
    #allocation6 [shape = 'u8[512]{0}', space=smem, size = 0x200, scoped, tag = 'input window, operand 1, single buffered']
    #allocation7 [shape = 'u8[512]{0}', space=smem, size = 0x200, scoped, tag = 'input window, operand 2, single buffered']
    #allocation8 [shape = 's32[1]{0}', space=sflag, size = 0x4, scoped, tag = 'scoped memory for tpu_custom_call.1']
    #allocation9 [shape = 'u8[8192]{0}', space=vmem, size = 0x2000, scoped, tag = 'output window, operand 0']
    %8 = vsyncpa [#allocation3], 0
    %s9 = scalar_lea.sflag [#allocation3], 1
    %10 = vsyncpa %s9, 0
    %11 = vsyncpa [#allocation5], 0
    %12 = vsyncpa [#allocation8], 0
    %13 = vsyncpa [#allocation4], 0
    %s14 = scalar_lea.sflag [#allocation4], 1
    %15 = vsyncpa %s14, 0
    loop: start=0, step=1, limit=4
    $region2: #{tpu_custom_call.1} parent=1 // loop_pre_header
      _
    $region3: #{tpu_custom_call.1} parent=1 // loop_header
      %s17 = sphi 0, %s21
      %p18 = scmp.ge.s32.totalorder %s17, 4
      %s24 = sphi 0, %s36
      %s25 = sphi 0, %s32
      %s26 = sphi 0, %s24
      %s27 = sphi 0, %s25
      %s28 = sphi 0, %s26
      %s29 = sphi 0, %s27
      %s41 = sphi 0, %s43
      %s44 = sphi 0, %s41
      %s45 = sphi 0, %s44
      %s61 = sphi 0, %s45
      %s65 = sphi 0, %s65
      %s67 = sphi 0, %s65
      %s68 = sphi 0, %s67
      %s82 = sphi 0, %s68
      %s86 = sphi 0, %s86
      %s88 = sphi 0, %s86
      %s89 = sphi 0, %s88
      %s103 = sphi 0, %s89
      %s111 = sphi 0, %s113
      %s114 = sphi 0, %s111
      %s115 = sphi 0, %s114
      %s131 = sphi 0, %s115
    $region4: #{tpu_custom_call.1} parent=1 // loop_header_branch
      %20 = sbr.rel (%p18) target = $region8
    $region5: #{tpu_custom_call.1} parent=1 // loop_body
      %s22 = ssub.s32 %s17, 1
      %s23 = ssub.s32 %s17, 2
      %s30 = sadd.s32 1, %s25
      %p31 = scmp.ge.s32.totalorder %s30, 1
      %s32 = scalar_select %p31, 0, %s30
      %s33 = sadd.s32 1, %s24
      %s34 = scalar_select %p31, %s33, %s24
      %p35 = scmp.ge.s32.totalorder %s34, 2
      %s36 = scalar_select %p35, 0, %s34
      %s37 = ssub.s32 %s24, %s36
      %s38 = ssub.s32 %s25, %s32
      %s39 = sor.u32 %s37, %s38
      %p40 = scmp.eq.s32.totalorder %s39, 0
      %s42 = sadd.s32 %s41, 1
      %s43 = scalar_select %p40, %s41, %s42
      %p46 = pneg %p40
      %p47 = scmp.eq.s32.totalorder %s17, 1
      %p48 = por %p46, %p47
      %p49 = scmp.ne.s32.totalorder %s41, %s44
      %p50 = scmp.eq.s32.totalorder %s17, 0
      %p51 = por %p49, %p50
      %p52 = scmp.ne.s32.totalorder %s41, %s44
      %p53 = scmp.eq.s32.totalorder %s22, 1
      %p54 = por %p52, %p53
      %p55 = scmp.ne.s32.totalorder %s44, %s45
      %p56 = scmp.eq.s32.totalorder %s22, 0
      %p57 = por %p55, %p56
      %p58 = scmp.ne.s32.totalorder %s44, %s45
      %p59 = scmp.eq.s32.totalorder %s23, 1
      %p60 = por %p58, %p59
      %p62 = scmp.ne.s32.totalorder %s45, %s61
      %p63 = scmp.eq.s32.totalorder %s23, 0
      %p64 = por %p62, %p63
      %s66 = sadd.s32 %s65, 1
      %p69 = scmp.eq.s32.totalorder %s17, 1
      %p70 = scmp.ne.s32.totalorder %s65, %s67
      %p71 = scmp.eq.s32.totalorder %s17, 0
      %p72 = por %p70, %p71
      %p73 = scmp.ne.s32.totalorder %s65, %s67
      %p74 = scmp.eq.s32.totalorder %s22, 1
      %p75 = por %p73, %p74
      %p76 = scmp.ne.s32.totalorder %s67, %s68
      %p77 = scmp.eq.s32.totalorder %s22, 0
      %p78 = por %p76, %p77
      %p79 = scmp.ne.s32.totalorder %s67, %s68
      %p80 = scmp.eq.s32.totalorder %s23, 1
      %p81 = por %p79, %p80
      %p83 = scmp.ne.s32.totalorder %s68, %s82
      %p84 = scmp.eq.s32.totalorder %s23, 0
      %p85 = por %p83, %p84
      %s87 = sadd.s32 %s86, 1
      %p90 = scmp.eq.s32.totalorder %s17, 1
      %p91 = scmp.ne.s32.totalorder %s86, %s88
      %p92 = scmp.eq.s32.totalorder %s17, 0
      %p93 = por %p91, %p92
      %p94 = scmp.ne.s32.totalorder %s86, %s88
      %p95 = scmp.eq.s32.totalorder %s22, 1
      %p96 = por %p94, %p95
      %p97 = scmp.ne.s32.totalorder %s88, %s89
      %p98 = scmp.eq.s32.totalorder %s22, 0
      %p99 = por %p97, %p98
      %p100 = scmp.ne.s32.totalorder %s88, %s89
      %p101 = scmp.eq.s32.totalorder %s23, 1
      %p102 = por %p100, %p101
      %p104 = scmp.ne.s32.totalorder %s89, %s103
      %p105 = scmp.eq.s32.totalorder %s23, 0
      %p106 = por %p104, %p105
      %s107 = ssub.s32 %s24, %s36
      %s108 = ssub.s32 %s25, %s32
      %s109 = sor.u32 %s107, %s108
      %p110 = scmp.eq.s32.totalorder %s109, 0
      %s112 = sadd.s32 %s111, 1
      %s113 = scalar_select %p110, %s111, %s112
      %p116 = pneg %p110
      %p117 = scmp.eq.s32.totalorder %s17, 1
      %p118 = por %p116, %p117
      %p119 = scmp.ne.s32.totalorder %s111, %s114
      %p120 = scmp.eq.s32.totalorder %s17, 0
      %p121 = por %p119, %p120
      %p122 = scmp.ne.s32.totalorder %s111, %s114
      %p123 = scmp.eq.s32.totalorder %s22, 1
      %p124 = por %p122, %p123
      %p125 = scmp.ne.s32.totalorder %s114, %s115
      %p126 = scmp.eq.s32.totalorder %s22, 0
      %p127 = por %p125, %p126
      %p128 = scmp.ne.s32.totalorder %s114, %s115
      %p129 = scmp.eq.s32.totalorder %s23, 1
      %p130 = por %p128, %p129
      %p132 = scmp.ne.s32.totalorder %s115, %s131
      %p133 = scmp.eq.s32.totalorder %s23, 0
      %p134 = por %p132, %p133
      %p135 = scmp.le.s32.totalorder 1, %s17
      %p136 = scmp.lt.s32.totalorder %s17, 3
      %p137 = pnand %p135, %p136
      %p138 = pneg %p137
      // Predicated region
      $region9: #{tpu_custom_call.1} parent=5 // pred_check
        _
      $region10: #{tpu_custom_call.1} parent=5 // pred_check_branch
        %140 = sbr.rel (%p137) target = $region12
      $region11: #{tpu_custom_call.1} parent=5 // pred_region
        %s141 = ssub.s32 %s17, 1
        // Predicated region
        $region13: #{tpu_custom_call.1} parent=11 // pred_check
          %p142 = pneg %p78
        $region14: #{tpu_custom_call.1} parent=11 // pred_check_branch
          %144 = sbr.rel (%p142) target = $region16
        $region15: #{tpu_custom_call.1} parent=11 // pred_region
          %s146 = ssub.s32 16, 16
          %147 = vsyncadd [#allocation5], %s146
          %s149 = sshll.u32 %s1, 4
          %s150 = int_to_ptr.vmem [resolvable:$true] %s149
          %152 = dma.vmem_to_smem %s150, 16, [#allocation6], [#allocation5]
        $region16: #{tpu_custom_call.1} parent=11 // pred_fallthru
          _
        // Predicated region
        $region17: #{tpu_custom_call.1} parent=11 // pred_check
          %p153 = pneg %p99
        $region18: #{tpu_custom_call.1} parent=11 // pred_check_branch
          %155 = sbr.rel (%p153) target = $region20
        $region19: #{tpu_custom_call.1} parent=11 // pred_region
          %s157 = ssub.s32 16, 16
          %158 = vsyncadd [#allocation8], %s157
          %s160 = sshll.u32 %s2, 4
          %s161 = int_to_ptr.vmem [resolvable:$true] %s160
          %163 = dma.vmem_to_smem %s161, 16, [#allocation7], [#allocation8]
        $region20: #{tpu_custom_call.1} parent=11 // pred_fallthru
          _
      $region12: #{tpu_custom_call.1} parent=5 // pred_fallthru
        _
      %p164 = scmp.lt.s32.totalorder %s17, 2
      // Predicated region
      $region21: #{tpu_custom_call.1} parent=5 // pred_check
        %p165 = pneg %p164
      $region22: #{tpu_custom_call.1} parent=5 // pred_check_branch
        %167 = sbr.rel (%p165) target = $region24
      $region23: #{tpu_custom_call.1} parent=5 // pred_region
        // Predicated region
        $region25: #{tpu_custom_call.1} parent=23 // pred_check
          %p168 = pneg %p51
        $region26: #{tpu_custom_call.1} parent=23 // pred_check_branch
          %170 = sbr.rel (%p168) target = $region28
        $region27: #{tpu_custom_call.1} parent=23 // pred_region
          %s171 = sand.u32 %s41, 1
          %s172 = scalar_lea.sflag [#allocation3], %s171
          %s173 = sand.u32 %s41, 1
          %s174 = smul.addr %s173, 6
          %s175 = scalar_lea.vmem [#allocation2], %s174
          %s177 = ssub.s32 96, 96
          %178 = vsyncadd %s172, %s177
          %s179 = smul.addr %s25, 2
          %s180 = smul.addr %s24, 6
          %s181 = sadd.s32 %s179, %s180
          %s182 = smul.addr %s181, 16
          %s183 = scalar_lea.hbm %s0, %s182
          %s184 = sshll.u32 %s175, 4
          %s185 = int_to_ptr.vmem [resolvable:$true] %s184
          %190 = dma.hbm_to_vmem [thread:$0]  %s183, 96, %s185, %s172, 32, 32, 2
        $region28: #{tpu_custom_call.1} parent=23 // pred_fallthru
          _
      $region24: #{tpu_custom_call.1} parent=5 // pred_fallthru
        _
      %p191 = scmp.le.s32.totalorder 1, %s17
      %p192 = scmp.lt.s32.totalorder %s17, 3
      %p193 = pnand %p191, %p192
      %p194 = pneg %p193
      // Predicated region
      $region29: #{tpu_custom_call.1} parent=5 // pred_check
        _
      $region30: #{tpu_custom_call.1} parent=5 // pred_check_branch
        %196 = sbr.rel (%p193) target = $region32
      $region31: #{tpu_custom_call.1} parent=5 // pred_region
        %s197 = ssub.s32 %s17, 1
        %s198 = sand.u32 %s44, 1
        %s199 = scalar_lea.sflag [#allocation3], %s198
        %s200 = sand.u32 %s44, 1
        %s201 = smul.addr %s200, 6
        %s202 = scalar_lea.vmem [#allocation2], %s201
        // Predicated region
        $region33: #{tpu_custom_call.1} parent=31 // pred_check
          %p203 = pneg %p57
        $region34: #{tpu_custom_call.1} parent=31 // pred_check_branch
          %205 = sbr.rel (%p203) target = $region36
        $region35: #{tpu_custom_call.1} parent=31 // pred_region
          %206 = dma.done %s199, 96
        $region36: #{tpu_custom_call.1} parent=31 // pred_fallthru
          _
        // Predicated region
        $region37: #{tpu_custom_call.1} parent=31 // pred_check
          %p207 = pneg %p78
        $region38: #{tpu_custom_call.1} parent=31 // pred_check_branch
          %209 = sbr.rel (%p207) target = $region40
        $region39: #{tpu_custom_call.1} parent=31 // pred_region
          %210 = dma.done [#allocation5], 16
        $region40: #{tpu_custom_call.1} parent=31 // pred_fallthru
          _
        // Predicated region
        $region41: #{tpu_custom_call.1} parent=31 // pred_check
          %p211 = pneg %p99
        $region42: #{tpu_custom_call.1} parent=31 // pred_check_branch
          %213 = sbr.rel (%p211) target = $region44
        $region43: #{tpu_custom_call.1} parent=31 // pred_region
          %214 = dma.done [#allocation8], 16
        $region44: #{tpu_custom_call.1} parent=31 // pred_fallthru
          _
        %215 = sfence
        %s216 = sand.u32 %s44, 1
        %s217 = scalar_lea.sflag [#allocation3], %s216
        %s218 = sand.u32 %s44, 1
        %s219 = smul.addr %s218, 6
        %s220 = scalar_lea.vmem [#allocation2], %s219
        %p221 = pneg %p57
        %p222 = pneg %p54
        %p223 = pneg %p78
        %p224 = pneg %p75
        %p225 = pneg %p99
        %p226 = pneg %p96
        %p227 = pneg %p127
        %p228 = pneg %p124
        %s229 = sand.u32 %s114, 1
        %s230 = scalar_lea.sflag [#allocation4], %s229
        %s231 = sand.u32 %s114, 1
        %s232 = smul.addr %s231, 8
        %s233 = scalar_lea.vmem [#allocation9], %s232
        %s234 = sld [smem:[#allocation6]]
        %s235 = sld [smem:[#allocation6 + $0x1]]
        %s236 = sld [smem:[#allocation6 + $0x2]]
        %s237 = sld [smem:[#allocation6 + $0x3]]
        %s238 = sld [smem:[#allocation6 + $0x4]]
        %s239 = sld [smem:[#allocation6 + $0x5]]
        %s240 = sld [smem:[#allocation6 + $0x6]]
        %s241 = sld [smem:[#allocation6 + $0x7]]
        %s242 = sld [smem:[#allocation6 + $0x8]]
        %s243 = sld [smem:[#allocation6 + $0x9]]
        %s244 = sld [smem:[#allocation6 + $0xa]]
        %s245 = sld [smem:[#allocation6 + $0xb]]
        %s246 = sld [smem:[#allocation7]]
        %s247 = sld [smem:[#allocation7 + $0x1]]
        %s248 = sld [smem:[#allocation7 + $0x2]]
        %s249 = sld [smem:[#allocation7 + $0x3]]
        %v250 = vld [vmem:[%s202] sm:$0x3]
        %s251 = scalar_lea.vmem %s202, 2 [#allocation2]
        %v252 = vld [vmem:[%s251] sm:$0x3]
        %s253 = scalar_lea.vmem %s202, 4 [#allocation2]
        %v254 = vld [vmem:[%s253] sm:$0x3]
        %v255 = vstv %s234
        %v256 = vmul.f32 %v250, %v255
        %v257 = vstv %s246
        %v258 = vadd.f32 %v256, %v257
        %v259 = vstv %s235
        %v260 = vmul.f32 %v252, %v259
        %v261 = vadd.f32 %v258, %v260
        %v262 = vstv %s236
        %v263 = vmul.f32 %v254, %v262
        %v264 = vadd.f32 %v261, %v263
        %v265 = vlaneseq
        %vm266 = vcmp.ge.s32.totalorder %v265, 0
        %vm267 = vcmp.lt.s32.totalorder %v265, 256
        %vm268 = vmand %vm266, %vm267
        %269 = vst.msk [vmem:[%s233] sm:$0x3] %vm268, %v264
        %v270 = vstv %s237
        %v271 = vmul.f32 %v250, %v270
        %v272 = vstv %s247
        %v273 = vadd.f32 %v271, %v272
        %v274 = vstv %s238
        %v275 = vmul.f32 %v252, %v274
        %v276 = vadd.f32 %v273, %v275
        %v277 = vstv %s239
        %v278 = vmul.f32 %v254, %v277
        %v279 = vadd.f32 %v276, %v278
        %s280 = scalar_lea.vmem %s233, 2 [#allocation9]
        %281 = vst.msk [vmem:[%s280] sm:$0x3] %vm268, %v279
        %v282 = vstv %s240
        %v283 = vmul.f32 %v250, %v282
        %v284 = vstv %s248
        %v285 = vadd.f32 %v283, %v284
        %v286 = vstv %s241
        %v287 = vmul.f32 %v252, %v286
        %v288 = vadd.f32 %v285, %v287
        %v289 = vstv %s242
        %v290 = vmul.f32 %v254, %v289
        %v291 = vadd.f32 %v288, %v290
        %s292 = scalar_lea.vmem %s233, 4 [#allocation9]
        %293 = vst.msk [vmem:[%s292] sm:$0x3] %vm268, %v291
        %v294 = vstv %s243
        %v295 = vmul.f32 %v250, %v294
        %v296 = vstv %s249
        %v297 = vadd.f32 %v295, %v296
        %v298 = vstv %s244
        %v299 = vmul.f32 %v252, %v298
        %v300 = vadd.f32 %v297, %v299
        %v301 = vstv %s245
        %v302 = vmul.f32 %v254, %v301
        %v303 = vadd.f32 %v300, %v302
        %s304 = scalar_lea.vmem %s233, 6 [#allocation9]
        %305 = vst.msk [vmem:[%s304] sm:$0x3] %vm268, %v303
        %s306 = sand.u32 %s114, 1
        %s307 = scalar_lea.sflag [#allocation4], %s306
        %s308 = sand.u32 %s114, 1
        %s309 = smul.addr %s308, 8
        %s310 = scalar_lea.vmem [#allocation9], %s309
        // Predicated region
        $region45: #{tpu_custom_call.1} parent=31 // pred_check
          %p311 = pneg %p124
        $region46: #{tpu_custom_call.1} parent=31 // pred_check_branch
          %313 = sbr.rel (%p311) target = $region48
        $region47: #{tpu_custom_call.1} parent=31 // pred_region
          %s315 = ssub.s32 128, 128
          %316 = vsyncadd %s307, %s315
          %s317 = smul.addr %s27, 2
          %s318 = smul.addr %s26, 8
          %s319 = sadd.s32 %s317, %s318
          %s320 = smul.addr %s319, 16
          %s321 = scalar_lea.hbm %s3, %s320
          %s322 = sshll.u32 %s310, 4
          %s323 = int_to_ptr.vmem [resolvable:$true] %s322
          %328 = dma.vmem_to_hbm [thread:$0]  %s323, 128, %s321, %s307, 32, 32, 2
        $region48: #{tpu_custom_call.1} parent=31 // pred_fallthru
          _
      $region32: #{tpu_custom_call.1} parent=5 // pred_fallthru
        _
      %p329 = scmp.le.s32.totalorder 2, %s17
      // Predicated region
      $region49: #{tpu_custom_call.1} parent=5 // pred_check
        %p330 = pneg %p329
      $region50: #{tpu_custom_call.1} parent=5 // pred_check_branch
        %332 = sbr.rel (%p330) target = $region52
      $region51: #{tpu_custom_call.1} parent=5 // pred_region
        %s333 = ssub.s32 %s17, 2
        // Predicated region
        $region53: #{tpu_custom_call.1} parent=51 // pred_check
          %p334 = pneg %p130
        $region54: #{tpu_custom_call.1} parent=51 // pred_check_branch
          %336 = sbr.rel (%p334) target = $region56
        $region55: #{tpu_custom_call.1} parent=51 // pred_region
          %s337 = sand.u32 %s115, 1
          %s338 = scalar_lea.sflag [#allocation4], %s337
          %s339 = sand.u32 %s115, 1
          %s340 = smul.addr %s339, 8
          %s341 = scalar_lea.vmem [#allocation9], %s340
          %342 = dma.done %s338, 128
        $region56: #{tpu_custom_call.1} parent=51 // pred_fallthru
          _
      $region52: #{tpu_custom_call.1} parent=5 // pred_fallthru
        _
    $region6: #{tpu_custom_call.1} parent=1 // loop_footer
      %s21 = sadd.s32 1, %s17
    $region7: #{tpu_custom_call.1} parent=1 // loop_footer_branch
      %16 = sbr.rel target = $region3
    $region8: #{tpu_custom_call.1} parent=1 // loop_exit
      _
    %343 = vsyncpa [#allocation3], 1
    %s344 = scalar_lea.sflag [#allocation3], 1
    %345 = vsyncpa %s344, 1
    %346 = vsyncpa [#allocation4], 1
    %s347 = scalar_lea.sflag [#allocation4], 1
    %348 = vsyncpa %s347, 1
    %349 = vsyncpa [#allocation5], 1
    %s350 = scalar_lea.sflag [#allocation5], 1
    %351 = vsyncpa %s350, 1
    %352 = vsyncpa [#allocation8], 1

</llo_original>
